<compile_context>
chip_gen: v7x
topology: tpu7x:2x2x1
jax: 0.10.0
libtpu: 0.0.40
codegen_flags: <defaults>
</compile_context>

<pallas_src>
import functools

import jax
import jax.numpy as jnp
from jax.experimental import pallas as pl
from jax.experimental.pallas import tpu as pltpu

# ---- model hyper-parameters (static, small shapes consistent with the module) ----
BATCH = 8                 # rows of one logical batch (BatchNorm batch)
IN_SIZE = 16
DIM = 32
N_RES_BLOCKS = 2
N_LAYERS = N_RES_BLOCKS * 2          # 4 Linear/ReLU/BN layers inside blocks
BN_EPS = 1e-5

# ---- packed-slab row layout (single (SLAB_ROWS, DIM) f32 operand) --------------
ROW_W_IN = 0                                    # (IN_SIZE, DIM)
ROW_W_RES = IN_SIZE                             # N_LAYERS x (DIM, DIM)
_VEC_BASE = IN_SIZE + N_LAYERS * DIM            # vector section, all 8-row blocks
ROW_B_IN = _VEC_BASE                            # (8, DIM)  broadcast
ROW_B_RES = ROW_B_IN + BATCH                    # N_LAYERS x (8, DIM)
ROW_GAMMA = ROW_B_RES + N_LAYERS * BATCH        # N_LAYERS x (8, DIM)
ROW_BETA = ROW_GAMMA + N_LAYERS * BATCH         # N_LAYERS x (8, DIM)
ROW_W_OUT = ROW_BETA + N_LAYERS * BATCH         # (8, DIM)  w_out^T broadcast
ROW_B_OUT = ROW_W_OUT + BATCH                   # (8, DIM)  (b_out / DIM) broadcast
SLAB_ROWS = ROW_B_OUT + BATCH                   # 264 rows, sublane multiple of 8


# ---- Pallas kernel: full ResidualModel forward for ONE logical batch -----------
def residual_model_kernel(x_ref, s_ref, o_ref):
    # x_ref: (BATCH, IN_SIZE)  VMEM   (one logical batch per grid step)
    # s_ref: (SLAB_ROWS, DIM)  VMEM   (grid-resident packed parameters)
    # o_ref: (BATCH, 1)        VMEM
    x = x_ref[...]

    # input projection: Linear(in_size, dim)
    h = (jnp.dot(x, s_ref[ROW_W_IN:ROW_W_IN + IN_SIZE, :],
                 preferred_element_type=jnp.float32)
         + s_ref[ROW_B_IN:ROW_B_IN + BATCH, :])

    # residual blocks (static unroll; 4 tiny layers total)
    for blk in range(N_RES_BLOCKS):
        res_in = h
        for l in range(2):
            idx = blk * 2 + l
            w_r0 = ROW_W_RES + idx * DIM                       # 8-aligned
            w = s_ref[w_r0:w_r0 + DIM, :]                      # (DIM, DIM)
            b = s_ref[ROW_B_RES + idx * BATCH:
                      ROW_B_RES + idx * BATCH + BATCH, :]      # (8, DIM) pre-bcast
            g = s_ref[ROW_GAMMA + idx * BATCH:
                      ROW_GAMMA + idx * BATCH + 1, :]          # (1, DIM)
            bt = s_ref[ROW_BETA + idx * BATCH:
                       ROW_BETA + idx * BATCH + 1, :]          # (1, DIM)

            # Linear(dim, dim) + ReLU
            h = jnp.dot(h, w, preferred_element_type=jnp.float32) + b
            h = jnp.maximum(h, 0.0)

            # BatchNorm1d (training-mode batch stats), single sublane reduce:
            #   stats = mean over batch of [h | h*h]  ->  (1, 2*DIM)
            stats = jnp.mean(jnp.concatenate([h, h * h], axis=1),
                             axis=0, keepdims=True)
            mean = stats[:, :DIM]
            var = jnp.maximum(stats[:, DIM:] - mean * mean, 0.0)
            a = g * jax.lax.rsqrt(var + BN_EPS)                # gamma folded scale
            c = bt - mean * a                                  # fused affine offset
            h = h * a + c
        h = res_in + h                                         # skip connection

    # output head: Linear(dim, 1) as VPU multiply + lane reduction.
    # b_out is packed as b_out/DIM in every lane, so the lane sum adds it back.
    w_out = s_ref[ROW_W_OUT:ROW_W_OUT + BATCH, :]              # (8, DIM)
    b_div = s_ref[ROW_B_OUT:ROW_B_OUT + BATCH, :]              # (8, DIM)
    out = jnp.sum(h * w_out + b_div, axis=1, keepdims=True)
    o_ref[...] = out.astype(o_ref.dtype)


# ---- wrapper --------------------------------------------------------------------
def pack_params(params):
    """Pack the 8 PyTorch-style parameter tensors into ONE (SLAB_ROWS, DIM) slab."""
    (w_in, b_in, w_res, b_res, gamma, beta, w_out, b_out) = params

    def bcast(v):                                  # (DIM,) / (1,DIM) -> (8, DIM)
        return jnp.broadcast_to(jnp.reshape(v, (1, DIM)), (BATCH, DIM))

    pieces = [w_in, w_res.reshape(N_LAYERS * DIM, DIM), bcast(b_in)]
    pieces += [bcast(b_res[i]) for i in range(N_LAYERS)]
    pieces += [bcast(gamma[i]) for i in range(N_LAYERS)]
    pieces += [bcast(beta[i]) for i in range(N_LAYERS)]
    pieces += [bcast(w_out.reshape(1, DIM)),                    # w_out^T
               jnp.broadcast_to(b_out.reshape(1, 1) / DIM, (BATCH, DIM))]
    slab = jnp.concatenate(pieces, axis=0).astype(jnp.float32)
    assert slab.shape == (SLAB_ROWS, DIM)
    return slab


@jax.jit
def residual_model(x_stack, slab):
    """x_stack: (N, BATCH, IN_SIZE) — N independent logical batches per call."""
    n = x_stack.shape[0]
    per_batch_flops = 2 * (BATCH * IN_SIZE * DIM
                           + N_LAYERS * BATCH * DIM * DIM
                           + BATCH * DIM)
    cost = pl.CostEstimate(
        flops=n * per_batch_flops,
        transcendentals=n * N_LAYERS * DIM,
        bytes_accessed=4 * (x_stack.size + slab.size + n * BATCH))
    return pl.pallas_call(
        residual_model_kernel,
        out_shape=jax.ShapeDtypeStruct((n, BATCH, 1), jnp.float32),
        grid=(n,),
        in_specs=[
            # per-step x tile (leading grid dim squeezed away)
            pl.BlockSpec((None, BATCH, IN_SIZE), lambda i: (i, 0, 0)),
            # parameter slab: constant block index -> VMEM-resident across grid
            pl.BlockSpec((SLAB_ROWS, DIM), lambda i: (0, 0)),
        ],
        out_specs=pl.BlockSpec((None, BATCH, 1), lambda i: (i, 0, 0)),
        compiler_params=pltpu.CompilerParams(
            dimension_semantics=("parallel",)),     # shards grid on v7x's 2 TCs
        cost_estimate=cost,
    )(x_stack, slab)


# ---- pure-JAX reference (original two-pass math, unpacked params) ----------------
def residual_model_ref(x, params):
    (w_in, b_in, w_res, b_res, gamma, beta, w_out, b_out) = params
    h = x.astype(jnp.float32) @ w_in + b_in
    for blk in range(N_RES_BLOCKS):
        r = h
        for l in range(2):
            idx = blk * 2 + l
            h = h @ w_res[idx] + b_res[idx]
            h = jnp.maximum(h, 0.0)
            mean = jnp.mean(h, axis=0, keepdims=True)
            var = jnp.mean((h - mean) ** 2, axis=0, keepdims=True)
            h = (h - mean) * jax.lax.rsqrt(var + BN_EPS) * gamma[idx] + beta[idx]
        h = r + h
    return h @ w_out + b_out


# ---- deterministic parameter init -------------------------------------------------
def init_params(key):
    ks = jax.random.split(key, 8)
    scale_in = 1.0 / jnp.sqrt(IN_SIZE)
    scale_d = 1.0 / jnp.sqrt(DIM)
    w_in = jax.random.uniform(ks[0], (IN_SIZE, DIM), jnp.float32, -scale_in, scale_in)
    b_in = jax.random.uniform(ks[1], (1, DIM), jnp.float32, -scale_in, scale_in)
    w_res = jax.random.uniform(
        ks[2], (N_LAYERS, DIM, DIM), jnp.float32, -scale_d, scale_d)
    b_res = jax.random.uniform(
        ks[3], (N_LAYERS, DIM), jnp.float32, -scale_d, scale_d)
    gamma = jnp.ones((N_LAYERS, DIM), jnp.float32)   # PyTorch BN default init
    beta = jnp.zeros((N_LAYERS, DIM), jnp.float32)
    w_out = jax.random.uniform(ks[4], (DIM, 1), jnp.float32, -scale_d, scale_d)
    b_out = jax.random.uniform(ks[5], (1, 1), jnp.float32, -scale_d, scale_d)
    return (w_in, b_in, w_res, b_res, gamma, beta, w_out, b_out)


if __name__ == "__main__":
    key = jax.random.PRNGKey(0)
    k_x, k_p = jax.random.split(key)

    N_BATCHES = 16                                   # independent logical batches
    x_stack = jax.random.normal(
        k_x, (N_BATCHES, BATCH, IN_SIZE), dtype=jnp.float32)
    params = init_params(k_p)
    slab = pack_params(params)                       # one-time layout plumbing

    out = residual_model(x_stack, slab)
    out = jax.block_until_ready(out)

    ref = jnp.stack([residual_model_ref(x_stack[i], params)
                     for i in range(N_BATCHES)], axis=0)
    assert out.shape == (N_BATCHES, BATCH, 1)
    assert jnp.allclose(out, ref, atol=1e-4, rtol=1e-4)
    print("KERNEL_OK")
</pallas_src>

<mosaic_0001>
module attributes {stable_mosaic.version = 11 : i64} {
  func.func @residual_model_kernel(%arg0: i32, %arg1: memref<1x8x16xf32, #tpu.memory_space<vmem>>, %arg2: memref<264x32xf32, #tpu.memory_space<vmem>>, %arg3: memref<1x8x1xf32, #tpu.memory_space<vmem>>) attributes {dimension_semantics = [#tpu.dimension_semantics<parallel>], iteration_bounds = array<i64: 16>, scalar_prefetch = 0 : i64, scratch_operands = 0 : i64, tpu.core_type = #tpu.core_type<tc>, window_params = [{transform_indices = @transform_0, window_bounds = array<i64: 1, 8, 16>}, {pipeline_mode = #tpu.pipeline_mode<synchronous>, transform_indices = @transform_1, window_bounds = array<i64: 264, 32>}, {transform_indices = @transform_2, window_bounds = array<i64: 1, 8, 1>}]} {
    %c0 = arith.constant 0 : index
    %c0_0 = arith.constant 0 : index
    %c0_1 = arith.constant 0 : index
    %0 = vector.load %arg1[%c0, %c0_0, %c0_1] : memref<1x8x16xf32, #tpu.memory_space<vmem>>, vector<1x8x16xf32>
    %1 = vector.shape_cast %0 : vector<1x8x16xf32> to vector<8x16xf32>
    %c0_2 = arith.constant 0 : index
    %c0_3 = arith.constant 0 : index
    %2 = vector.load %arg2[%c0_2, %c0_3] : memref<264x32xf32, #tpu.memory_space<vmem>>, vector<16x32xf32>
    %cst = arith.constant dense<0.000000e+00> : vector<8x32xf32>
    %3 = tpu.matmul %1, %2, %cst {dimension_numbers = #tpu.dot_dimension_numbers<[1], [0], [0], [1], [0, 0, 1, 1], [], []>} : vector<8x16xf32>, vector<16x32xf32>, vector<8x32xf32> -> vector<8x32xf32>
    %c144 = arith.constant 144 : index
    %c0_4 = arith.constant 0 : index
    %4 = vector.load %arg2[%c144, %c0_4] : memref<264x32xf32, #tpu.memory_space<vmem>>, vector<8x32xf32>
    %5 = arith.addf %3, %4 : vector<8x32xf32>
    %c16 = arith.constant 16 : index
    %c0_5 = arith.constant 0 : index
    %6 = vector.load %arg2[%c16, %c0_5] : memref<264x32xf32, #tpu.memory_space<vmem>>, vector<32x32xf32>
    %c152 = arith.constant 152 : index
    %c0_6 = arith.constant 0 : index
    %7 = vector.load %arg2[%c152, %c0_6] : memref<264x32xf32, #tpu.memory_space<vmem>>, vector<8x32xf32>
    %c184 = arith.constant 184 : index
    %c0_7 = arith.constant 0 : index
    %8 = vector.load %arg2[%c184, %c0_7] : memref<264x32xf32, #tpu.memory_space<vmem>>, vector<1x32xf32>
    %c216 = arith.constant 216 : index
    %c0_8 = arith.constant 0 : index
    %9 = vector.load %arg2[%c216, %c0_8] : memref<264x32xf32, #tpu.memory_space<vmem>>, vector<1x32xf32>
    %cst_9 = arith.constant dense<0.000000e+00> : vector<8x32xf32>
    %10 = tpu.matmul %5, %6, %cst_9 {dimension_numbers = #tpu.dot_dimension_numbers<[1], [0], [0], [1], [0, 0, 1, 1], [], []>} : vector<8x32xf32>, vector<32x32xf32>, vector<8x32xf32> -> vector<8x32xf32>
    %11 = arith.addf %10, %7 : vector<8x32xf32>
    %cst_10 = arith.constant 0.000000e+00 : f32
    %12 = vector.broadcast %cst_10 : f32 to vector<8x32xf32>
    %13 = arith.maximumf %11, %12 : vector<8x32xf32>
    %14 = arith.mulf %13, %13 : vector<8x32xf32>
    %15 = tpu.concatenate %13, %14 in 1 : vector<8x32xf32>, vector<8x32xf32> -> vector<8x64xf32>
    %cst_11 = arith.constant dense<0.000000e+00> : vector<64xf32>
    %16 = vector.multi_reduction <add>, %15, %cst_11 [0] : vector<8x64xf32> to vector<64xf32>
    %17 = vector.shape_cast %16 : vector<64xf32> to vector<1x64xf32>
    %cst_12 = arith.constant 8.000000e+00 : f32
    %18 = vector.broadcast %cst_12 : f32 to vector<1x64xf32>
    %19 = arith.divf %17, %18 : vector<1x64xf32>
    %20 = vector.extract_strided_slice %19 {offsets = [0, 0], sizes = [1, 32], strides = [1, 1]} : vector<1x64xf32> to vector<1x32xf32>
    %21 = vector.extract_strided_slice %19 {offsets = [0, 32], sizes = [1, 32], strides = [1, 1]} : vector<1x64xf32> to vector<1x32xf32>
    %22 = arith.mulf %20, %20 : vector<1x32xf32>
    %23 = arith.subf %21, %22 : vector<1x32xf32>
    %cst_13 = arith.constant 0.000000e+00 : f32
    %24 = vector.broadcast %cst_13 : f32 to vector<1x32xf32>
    %25 = arith.maximumf %23, %24 : vector<1x32xf32>
    %cst_14 = arith.constant 9.99999974E-6 : f32
    %26 = vector.broadcast %cst_14 : f32 to vector<1x32xf32>
    %27 = arith.addf %25, %26 : vector<1x32xf32>
    %28 = math.rsqrt %27 : vector<1x32xf32>
    %29 = arith.mulf %8, %28 : vector<1x32xf32>
    %30 = arith.mulf %20, %29 : vector<1x32xf32>
    %31 = arith.subf %9, %30 : vector<1x32xf32>
    %32 = vector.broadcast %29 : vector<1x32xf32> to vector<8x32xf32>
    %33 = arith.mulf %13, %32 : vector<8x32xf32>
    %34 = vector.broadcast %31 : vector<1x32xf32> to vector<8x32xf32>
    %35 = arith.addf %33, %34 : vector<8x32xf32>
    %c48 = arith.constant 48 : index
    %c0_15 = arith.constant 0 : index
    %36 = vector.load %arg2[%c48, %c0_15] : memref<264x32xf32, #tpu.memory_space<vmem>>, vector<32x32xf32>
    %c160 = arith.constant 160 : index
    %c0_16 = arith.constant 0 : index
    %37 = vector.load %arg2[%c160, %c0_16] : memref<264x32xf32, #tpu.memory_space<vmem>>, vector<8x32xf32>
    %c192 = arith.constant 192 : index
    %c0_17 = arith.constant 0 : index
    %38 = vector.load %arg2[%c192, %c0_17] : memref<264x32xf32, #tpu.memory_space<vmem>>, vector<1x32xf32>
    %c224 = arith.constant 224 : index
    %c0_18 = arith.constant 0 : index
    %39 = vector.load %arg2[%c224, %c0_18] : memref<264x32xf32, #tpu.memory_space<vmem>>, vector<1x32xf32>
    %cst_19 = arith.constant dense<0.000000e+00> : vector<8x32xf32>
    %40 = tpu.matmul %35, %36, %cst_19 {dimension_numbers = #tpu.dot_dimension_numbers<[1], [0], [0], [1], [0, 0, 1, 1], [], []>} : vector<8x32xf32>, vector<32x32xf32>, vector<8x32xf32> -> vector<8x32xf32>
    %41 = arith.addf %40, %37 : vector<8x32xf32>
    %cst_20 = arith.constant 0.000000e+00 : f32
    %42 = vector.broadcast %cst_20 : f32 to vector<8x32xf32>
    %43 = arith.maximumf %41, %42 : vector<8x32xf32>
    %44 = arith.mulf %43, %43 : vector<8x32xf32>
    %45 = tpu.concatenate %43, %44 in 1 : vector<8x32xf32>, vector<8x32xf32> -> vector<8x64xf32>
    %cst_21 = arith.constant dense<0.000000e+00> : vector<64xf32>
    %46 = vector.multi_reduction <add>, %45, %cst_21 [0] : vector<8x64xf32> to vector<64xf32>
    %47 = vector.shape_cast %46 : vector<64xf32> to vector<1x64xf32>
    %cst_22 = arith.constant 8.000000e+00 : f32
    %48 = vector.broadcast %cst_22 : f32 to vector<1x64xf32>
    %49 = arith.divf %47, %48 : vector<1x64xf32>
    %50 = vector.extract_strided_slice %49 {offsets = [0, 0], sizes = [1, 32], strides = [1, 1]} : vector<1x64xf32> to vector<1x32xf32>
    %51 = vector.extract_strided_slice %49 {offsets = [0, 32], sizes = [1, 32], strides = [1, 1]} : vector<1x64xf32> to vector<1x32xf32>
    %52 = arith.mulf %50, %50 : vector<1x32xf32>
    %53 = arith.subf %51, %52 : vector<1x32xf32>
    %cst_23 = arith.constant 0.000000e+00 : f32
    %54 = vector.broadcast %cst_23 : f32 to vector<1x32xf32>
    %55 = arith.maximumf %53, %54 : vector<1x32xf32>
    %cst_24 = arith.constant 9.99999974E-6 : f32
    %56 = vector.broadcast %cst_24 : f32 to vector<1x32xf32>
    %57 = arith.addf %55, %56 : vector<1x32xf32>
    %58 = math.rsqrt %57 : vector<1x32xf32>
    %59 = arith.mulf %38, %58 : vector<1x32xf32>
    %60 = arith.mulf %50, %59 : vector<1x32xf32>
    %61 = arith.subf %39, %60 : vector<1x32xf32>
    %62 = vector.broadcast %59 : vector<1x32xf32> to vector<8x32xf32>
    %63 = arith.mulf %43, %62 : vector<8x32xf32>
    %64 = vector.broadcast %61 : vector<1x32xf32> to vector<8x32xf32>
    %65 = arith.addf %63, %64 : vector<8x32xf32>
    %66 = arith.addf %5, %65 : vector<8x32xf32>
    %c80 = arith.constant 80 : index
    %c0_25 = arith.constant 0 : index
    %67 = vector.load %arg2[%c80, %c0_25] : memref<264x32xf32, #tpu.memory_space<vmem>>, vector<32x32xf32>
    %c168 = arith.constant 168 : index
    %c0_26 = arith.constant 0 : index
    %68 = vector.load %arg2[%c168, %c0_26] : memref<264x32xf32, #tpu.memory_space<vmem>>, vector<8x32xf32>
    %c200 = arith.constant 200 : index
    %c0_27 = arith.constant 0 : index
    %69 = vector.load %arg2[%c200, %c0_27] : memref<264x32xf32, #tpu.memory_space<vmem>>, vector<1x32xf32>
    %c232 = arith.constant 232 : index
    %c0_28 = arith.constant 0 : index
    %70 = vector.load %arg2[%c232, %c0_28] : memref<264x32xf32, #tpu.memory_space<vmem>>, vector<1x32xf32>
    %cst_29 = arith.constant dense<0.000000e+00> : vector<8x32xf32>
    %71 = tpu.matmul %66, %67, %cst_29 {dimension_numbers = #tpu.dot_dimension_numbers<[1], [0], [0], [1], [0, 0, 1, 1], [], []>} : vector<8x32xf32>, vector<32x32xf32>, vector<8x32xf32> -> vector<8x32xf32>
    %72 = arith.addf %71, %68 : vector<8x32xf32>
    %cst_30 = arith.constant 0.000000e+00 : f32
    %73 = vector.broadcast %cst_30 : f32 to vector<8x32xf32>
    %74 = arith.maximumf %72, %73 : vector<8x32xf32>
    %75 = arith.mulf %74, %74 : vector<8x32xf32>
    %76 = tpu.concatenate %74, %75 in 1 : vector<8x32xf32>, vector<8x32xf32> -> vector<8x64xf32>
    %cst_31 = arith.constant dense<0.000000e+00> : vector<64xf32>
    %77 = vector.multi_reduction <add>, %76, %cst_31 [0] : vector<8x64xf32> to vector<64xf32>
    %78 = vector.shape_cast %77 : vector<64xf32> to vector<1x64xf32>
    %cst_32 = arith.constant 8.000000e+00 : f32
    %79 = vector.broadcast %cst_32 : f32 to vector<1x64xf32>
    %80 = arith.divf %78, %79 : vector<1x64xf32>
    %81 = vector.extract_strided_slice %80 {offsets = [0, 0], sizes = [1, 32], strides = [1, 1]} : vector<1x64xf32> to vector<1x32xf32>
    %82 = vector.extract_strided_slice %80 {offsets = [0, 32], sizes = [1, 32], strides = [1, 1]} : vector<1x64xf32> to vector<1x32xf32>
    %83 = arith.mulf %81, %81 : vector<1x32xf32>
    %84 = arith.subf %82, %83 : vector<1x32xf32>
    %cst_33 = arith.constant 0.000000e+00 : f32
    %85 = vector.broadcast %cst_33 : f32 to vector<1x32xf32>
    %86 = arith.maximumf %84, %85 : vector<1x32xf32>
    %cst_34 = arith.constant 9.99999974E-6 : f32
    %87 = vector.broadcast %cst_34 : f32 to vector<1x32xf32>
    %88 = arith.addf %86, %87 : vector<1x32xf32>
    %89 = math.rsqrt %88 : vector<1x32xf32>
    %90 = arith.mulf %69, %89 : vector<1x32xf32>
    %91 = arith.mulf %81, %90 : vector<1x32xf32>
    %92 = arith.subf %70, %91 : vector<1x32xf32>
    %93 = vector.broadcast %90 : vector<1x32xf32> to vector<8x32xf32>
    %94 = arith.mulf %74, %93 : vector<8x32xf32>
    %95 = vector.broadcast %92 : vector<1x32xf32> to vector<8x32xf32>
    %96 = arith.addf %94, %95 : vector<8x32xf32>
    %c112 = arith.constant 112 : index
    %c0_35 = arith.constant 0 : index
    %97 = vector.load %arg2[%c112, %c0_35] : memref<264x32xf32, #tpu.memory_space<vmem>>, vector<32x32xf32>
    %c176 = arith.constant 176 : index
    %c0_36 = arith.constant 0 : index
    %98 = vector.load %arg2[%c176, %c0_36] : memref<264x32xf32, #tpu.memory_space<vmem>>, vector<8x32xf32>
    %c208 = arith.constant 208 : index
    %c0_37 = arith.constant 0 : index
    %99 = vector.load %arg2[%c208, %c0_37] : memref<264x32xf32, #tpu.memory_space<vmem>>, vector<1x32xf32>
    %c240 = arith.constant 240 : index
    %c0_38 = arith.constant 0 : index
    %100 = vector.load %arg2[%c240, %c0_38] : memref<264x32xf32, #tpu.memory_space<vmem>>, vector<1x32xf32>
    %cst_39 = arith.constant dense<0.000000e+00> : vector<8x32xf32>
    %101 = tpu.matmul %96, %97, %cst_39 {dimension_numbers = #tpu.dot_dimension_numbers<[1], [0], [0], [1], [0, 0, 1, 1], [], []>} : vector<8x32xf32>, vector<32x32xf32>, vector<8x32xf32> -> vector<8x32xf32>
    %102 = arith.addf %101, %98 : vector<8x32xf32>
    %cst_40 = arith.constant 0.000000e+00 : f32
    %103 = vector.broadcast %cst_40 : f32 to vector<8x32xf32>
    %104 = arith.maximumf %102, %103 : vector<8x32xf32>
    %105 = arith.mulf %104, %104 : vector<8x32xf32>
    %106 = tpu.concatenate %104, %105 in 1 : vector<8x32xf32>, vector<8x32xf32> -> vector<8x64xf32>
    %cst_41 = arith.constant dense<0.000000e+00> : vector<64xf32>
    %107 = vector.multi_reduction <add>, %106, %cst_41 [0] : vector<8x64xf32> to vector<64xf32>
    %108 = vector.shape_cast %107 : vector<64xf32> to vector<1x64xf32>
    %cst_42 = arith.constant 8.000000e+00 : f32
    %109 = vector.broadcast %cst_42 : f32 to vector<1x64xf32>
    %110 = arith.divf %108, %109 : vector<1x64xf32>
    %111 = vector.extract_strided_slice %110 {offsets = [0, 0], sizes = [1, 32], strides = [1, 1]} : vector<1x64xf32> to vector<1x32xf32>
    %112 = vector.extract_strided_slice %110 {offsets = [0, 32], sizes = [1, 32], strides = [1, 1]} : vector<1x64xf32> to vector<1x32xf32>
    %113 = arith.mulf %111, %111 : vector<1x32xf32>
    %114 = arith.subf %112, %113 : vector<1x32xf32>
    %cst_43 = arith.constant 0.000000e+00 : f32
    %115 = vector.broadcast %cst_43 : f32 to vector<1x32xf32>
    %116 = arith.maximumf %114, %115 : vector<1x32xf32>
    %cst_44 = arith.constant 9.99999974E-6 : f32
    %117 = vector.broadcast %cst_44 : f32 to vector<1x32xf32>
    %118 = arith.addf %116, %117 : vector<1x32xf32>
    %119 = math.rsqrt %118 : vector<1x32xf32>
    %120 = arith.mulf %99, %119 : vector<1x32xf32>
    %121 = arith.mulf %111, %120 : vector<1x32xf32>
    %122 = arith.subf %100, %121 : vector<1x32xf32>
    %123 = vector.broadcast %120 : vector<1x32xf32> to vector<8x32xf32>
    %124 = arith.mulf %104, %123 : vector<8x32xf32>
    %125 = vector.broadcast %122 : vector<1x32xf32> to vector<8x32xf32>
    %126 = arith.addf %124, %125 : vector<8x32xf32>
    %127 = arith.addf %66, %126 : vector<8x32xf32>
    %c248 = arith.constant 248 : index
    %c0_45 = arith.constant 0 : index
    %128 = vector.load %arg2[%c248, %c0_45] : memref<264x32xf32, #tpu.memory_space<vmem>>, vector<8x32xf32>
    %c256 = arith.constant 256 : index
    %c0_46 = arith.constant 0 : index
    %129 = vector.load %arg2[%c256, %c0_46] : memref<264x32xf32, #tpu.memory_space<vmem>>, vector<8x32xf32>
    %130 = arith.mulf %127, %128 : vector<8x32xf32>
    %131 = arith.addf %130, %129 : vector<8x32xf32>
    %cst_47 = arith.constant dense<0.000000e+00> : vector<8xf32>
    %132 = vector.multi_reduction <add>, %131, %cst_47 [1] : vector<8x32xf32> to vector<8xf32>
    %133 = vector.shape_cast %132 : vector<8xf32> to vector<8x1xf32>
    %c0_48 = arith.constant 0 : index
    %c0_49 = arith.constant 0 : index
    %c0_50 = arith.constant 0 : index
    %134 = vector.load %arg3[%c0_48, %c0_49, %c0_50] : memref<1x8x1xf32, #tpu.memory_space<vmem>>, vector<1x8x1xf32>
    %135 = vector.shape_cast %134 : vector<1x8x1xf32> to vector<8x1xf32>
    %136 = vector.shape_cast %133 : vector<8x1xf32> to vector<1x8x1xf32>
    tpu.vector_store %arg3[%c0_48, %c0_49, %c0_50], %136 {strides = array<i32>} : memref<1x8x1xf32, #tpu.memory_space<vmem>>, vector<1x8x1xf32>,
    return
  }
  func.func @transform_0(%arg0: i32) -> (i32, i32, i32) {
    %c0_i32 = arith.constant 0 : i32
    %c0_i32_0 = arith.constant 0 : i32
    %c0_i32_1 = arith.constant 0 : i32
    return %arg0, %c0_i32, %c0_i32_0 : i32, i32, i32
  }
  func.func @transform_1(%arg0: i32) -> (i32, i32) {
    %c0_i32 = arith.constant 0 : i32
    %c0_i32_0 = arith.constant 0 : i32
    %c0_i32_1 = arith.constant 0 : i32
    return %c0_i32, %c0_i32_0 : i32, i32
  }
  func.func @transform_2(%arg0: i32) -> (i32, i32, i32) {
    %c0_i32 = arith.constant 0 : i32
    %c0_i32_0 = arith.constant 0 : i32
    %c0_i32_1 = arith.constant 0 : i32
    return %arg0, %c0_i32, %c0_i32_0 : i32, i32, i32
  }
}

</mosaic_0001>

<llo_original>
// kernel: residual_model.1
$region0: #{residual_model.1}
  #allocation0 [shape = 'u32[]', space=smem, size = 0x4, offset = 0x4, fixed_abs, tag = 'smem constant byte address 0x4 - core index']
  #allocation1 [shape = 'u32[144,128]{1,0:T(1,128)}', space=vmem, size = 0x12000, scoped, tag = 'internal scratch']
  %s0 = inlined_call_operand.vmem [shape: f32[16,8,16], index: 0, kind: input, shape index: {}]
  %s1 = inlined_call_operand.vmem [shape: f32[264,32], index: 1, kind: input, shape index: {}]
  %s2 = inlined_call_operand.vmem [shape: f32[16,8,1], index: 2, kind: output, shape index: {}]
  %s3 = sld [smem:[#allocation0]]
  $region41: #{residual_model.1} parent=0
    _
  %s5 = ssub.s32 1, %s3
  %s6 = scalar_select 0, %s5, %s3
  loop: start=0, step=1, limit=18
  $region2: #{residual_model.1} parent=0 // loop_pre_header
    _
  $region3: #{residual_model.1} parent=0 // loop_header
    %s8 = sphi 0, %s12
    %p9 = scmp.ge.s32.totalorder %s8, 18
    %s18 = sphi 0, %s20
    %s21 = sphi 0, %s18
    %s22 = sphi 0, %s21
    %s38 = sphi 0, %s22
    %s42 = sphi 0, %s42
    %s44 = sphi 0, %s42
    %s45 = sphi 0, %s44
    %s59 = sphi 0, %s45
    %s65 = sphi 0, %s67
    %s68 = sphi 0, %s65
    %s69 = sphi 0, %s68
    %s85 = sphi 0, %s69
  $region4: #{residual_model.1} parent=0 // loop_header_branch
    %11 = sbr.rel (%p9) target = $region8
  $region5: #{residual_model.1} parent=0 // loop_body
    %s13 = ssub.s32 %s8, 1
    %s14 = ssub.s32 %s8, 2
    %s15 = sadd.s32 %s8, 1
    %s16 = ssub.s32 %s8, %s15
    %p17 = scmp.eq.s32.totalorder %s16, 0
    %s19 = sadd.s32 %s18, 1
    %s20 = scalar_select %p17, %s18, %s19
    %p23 = pneg %p17
    %p24 = scmp.eq.s32.totalorder %s8, 15
    %p25 = por %p23, %p24
    %p26 = scmp.ne.s32.totalorder %s18, %s21
    %p27 = scmp.eq.s32.totalorder %s8, 0
    %p28 = por %p26, %p27
    %p29 = scmp.ne.s32.totalorder %s18, %s21
    %p30 = scmp.eq.s32.totalorder %s13, 15
    %p31 = por %p29, %p30
    %p32 = scmp.ne.s32.totalorder %s21, %s22
    %p33 = scmp.eq.s32.totalorder %s13, 0
    %p34 = por %p32, %p33
    %p35 = scmp.ne.s32.totalorder %s21, %s22
    %p36 = scmp.eq.s32.totalorder %s14, 15
    %p37 = por %p35, %p36
    %p39 = scmp.ne.s32.totalorder %s22, %s38
    %p40 = scmp.eq.s32.totalorder %s14, 0
    %p41 = por %p39, %p40
    %s43 = sadd.s32 %s42, 1
    %p46 = scmp.eq.s32.totalorder %s8, 15
    %p47 = scmp.ne.s32.totalorder %s42, %s44
    %p48 = scmp.eq.s32.totalorder %s8, 0
    %p49 = por %p47, %p48
    %p50 = scmp.ne.s32.totalorder %s42, %s44
    %p51 = scmp.eq.s32.totalorder %s13, 15
    %p52 = por %p50, %p51
    %p53 = scmp.ne.s32.totalorder %s44, %s45
    %p54 = scmp.eq.s32.totalorder %s13, 0
    %p55 = por %p53, %p54
    %p56 = scmp.ne.s32.totalorder %s44, %s45
    %p57 = scmp.eq.s32.totalorder %s14, 15
    %p58 = por %p56, %p57
    %p60 = scmp.ne.s32.totalorder %s45, %s59
    %p61 = scmp.eq.s32.totalorder %s14, 0
    %p62 = por %p60, %p61
    %s63 = ssub.s32 %s8, %s15
    %p64 = scmp.eq.s32.totalorder %s63, 0
    %s66 = sadd.s32 %s65, 1
    %s67 = scalar_select %p64, %s65, %s66
    %p70 = pneg %p64
    %p71 = scmp.eq.s32.totalorder %s8, 15
    %p72 = por %p70, %p71
    %p73 = scmp.ne.s32.totalorder %s65, %s68
    %p74 = scmp.eq.s32.totalorder %s8, 0
    %p75 = por %p73, %p74
    %p76 = scmp.ne.s32.totalorder %s65, %s68
    %p77 = scmp.eq.s32.totalorder %s13, 15
    %p78 = por %p76, %p77
    %p79 = scmp.ne.s32.totalorder %s68, %s69
    %p80 = scmp.eq.s32.totalorder %s13, 0
    %p81 = por %p79, %p80
    %p82 = scmp.ne.s32.totalorder %s68, %s69
    %p83 = scmp.eq.s32.totalorder %s14, 15
    %p84 = por %p82, %p83
    %p86 = scmp.ne.s32.totalorder %s69, %s85
    %p87 = scmp.eq.s32.totalorder %s14, 0
    %p88 = por %p86, %p87
    %p89 = scmp.le.s32.totalorder 1, %s8
    %p90 = scmp.lt.s32.totalorder %s8, 17
    %p91 = pnand %p89, %p90
    %p92 = pneg %p91
    // Predicated region
    $region9: #{residual_model.1} parent=5 // pred_check
      _
    $region10: #{residual_model.1} parent=5 // pred_check_branch
      %94 = sbr.rel (%p91) target = $region12
    $region11: #{residual_model.1} parent=5 // pred_region
      %s95 = ssub.s32 %s8, 1
      // Predicated region
      $region13: #{residual_model.1} parent=11 // pred_check
        %p96 = pneg %p55
      $region14: #{residual_model.1} parent=11 // pred_check_branch
        %98 = sbr.rel (%p96) target = $region16
      $region15: #{residual_model.1} parent=11 // pred_region
        _
      $region16: #{residual_model.1} parent=11 // pred_fallthru
        _
    $region12: #{residual_model.1} parent=5 // pred_fallthru
      _
    %p99 = scmp.lt.s32.totalorder %s8, 16
    // Predicated region
    $region17: #{residual_model.1} parent=5 // pred_check
      %p100 = pneg %p99
    $region18: #{residual_model.1} parent=5 // pred_check_branch
      %102 = sbr.rel (%p100) target = $region20
    $region19: #{residual_model.1} parent=5 // pred_region
      // Predicated region
      $region21: #{residual_model.1} parent=19 // pred_check
        %p103 = pneg %p28
      $region22: #{residual_model.1} parent=19 // pred_check_branch
        %105 = sbr.rel (%p103) target = $region24
      $region23: #{residual_model.1} parent=19 // pred_region
        %p106 = scmp.lt.s32.totalorder %s8, 15
        %s107 = scalar_select %p106, %s8, 15
        %s108 = smul.addr %s107, 8
        %s109 = scalar_lea.vmem %s0, %s108
      $region24: #{residual_model.1} parent=19 // pred_fallthru
        _
    $region20: #{residual_model.1} parent=5 // pred_fallthru
      _
    %p110 = scmp.le.s32.totalorder 1, %s8
    %p111 = scmp.lt.s32.totalorder %s8, 17
    %p112 = pnand %p110, %p111
    %p113 = pneg %p112
    // Predicated region
    $region25: #{residual_model.1} parent=5 // pred_check
      _
    $region26: #{residual_model.1} parent=5 // pred_check_branch
      %115 = sbr.rel (%p112) target = $region28
    $region27: #{residual_model.1} parent=5 // pred_region
      %s116 = ssub.s32 %s8, 1
      %p117 = scmp.lt.s32.totalorder %s13, 15
      %s118 = scalar_select %p117, %s13, 15
      %s119 = smul.addr %s118, 8
      %s120 = scalar_lea.vmem %s0, %s119
      %p121 = pneg %p34
      %p122 = pneg %p31
      %p123 = pneg %p55
      %p124 = pneg %p52
      %p125 = pneg %p81
      %p126 = pneg %p78
      %p127 = scmp.lt.s32.totalorder %s13, 15
      %s128 = scalar_select %p127, %s13, 15
      %s129 = smul.addr %s128, 8
      %s130 = scalar_lea.vmem %s2, %s129
      %p131 = scmp.lt.s32.totalorder %s13, 15
      %s132 = scalar_select %p131, %s13, 15
      %s133 = smul.addr %s132, 8
      %s134 = scalar_lea.vmem %s0, %s133
      %p135 = scmp.lt.s32.totalorder %s13, 15
      %s136 = scalar_select %p135, %s13, 15
      %s137 = smul.addr %s136, 8
      %s138 = scalar_lea.vmem %s2, %s137
      %v139 = vld [vmem:[%s134] sm:$0xff]
      %v140 = vld [vmem:[%s1] sm:$0xff]
      %v141 = vld [vmem:[%s1 + $0x8] sm:$0xff]
      %v142 = vld [vmem:[%s1 + $0x90] sm:$0xff]
      %vm143 = vcmask 130048
      %v145 = vsel %vm143, %v139, 0
      %147 = vmatprep.subr.mxu0 0.0
      %148 = vmatpush1.msra.mxu0 %v140
      %149 = vmatprep.subr.mxu0 0.0
      %150 = vmatpush1.msra.mxu0 %v141
      %151 = vmatprep.subr.mxu0 0.0
      %152 = vmatpush1.msra.mxu0 0.0
      %153 = vmatprep.subr.mxu0 0.0
      %154 = vmatpush1.msra.mxu0 0.0
      %155 = vmatprep.subr.mxu0 0.0
      %156 = vmatpush1.msra.mxu0 0.0
      %157 = vmatprep.subr.mxu0 0.0
      %158 = vmatpush1.msra.mxu0 0.0
      %159 = vmatprep.subr.mxu0 0.0
      %160 = vmatpush1.msra.mxu0 0.0
      %161 = vmatprep.subr.mxu0 0.0
      %162 = vmatpush1.msra.mxu0 0.0
      %163 = vmatprep.subr.mxu0 0.0
      %164 = vmatpush1.msra.mxu0 0.0
      %165 = vmatprep.subr.mxu0 0.0
      %166 = vmatpush1.msra.mxu0 0.0
      %167 = vmatprep.subr.mxu0 0.0
      %168 = vmatpush1.msra.mxu0 0.0
      %169 = vmatprep.subr.mxu0 0.0
      %170 = vmatpush1.msra.mxu0 0.0
      %171 = vmatprep.subr.mxu0 0.0
      %172 = vmatpush1.msra.mxu0 0.0
      %173 = vmatprep.subr.mxu0 0.0
      %174 = vmatpush1.msra.mxu0 0.0
      %175 = vmatprep.subr.mxu0 0.0
      %176 = vmatpush1.msra.mxu0 0.0
      %177 = vmatprep.subr.mxu0 0.0
      %178 = vmatpush1.msra.mxu0 0.0
      %179 = vmatprep.subr.mxu0 0.0
      %180 = vmatpush1.msra.mxu0 0.0
      %181 = vmatprep.subr.mxu0 0.0
      %182 = vmatpush1.msra.mxu0 0.0
      %183 = vmatprep.subr.mxu0 0.0
      %184 = vmatpush1.msra.mxu0 0.0
      %185 = vmatprep.subr.mxu0 0.0
      %186 = vmatpush1.msra.mxu0 0.0
      %187 = vmatprep.subr.mxu0 0.0
      %188 = vmatpush1.msra.mxu0 0.0
      %189 = vmatprep.subr.mxu0 0.0
      %190 = vmatpush1.msra.mxu0 0.0
      %191 = vmatprep.subr.mxu0 0.0
      %192 = vmatpush1.msra.mxu0 0.0
      %193 = vmatprep.subr.mxu0 0.0
      %194 = vmatpush1.msra.mxu0 0.0
      %195 = vmatprep.subr.mxu0 0.0
      %196 = vmatpush1.msra.mxu0 0.0
      %197 = vmatprep.subr.mxu0 0.0
      %198 = vmatpush1.msra.mxu0 0.0
      %199 = vmatprep.subr.mxu0 0.0
      %200 = vmatpush1.msra.mxu0 0.0
      %201 = vmatprep.subr.mxu0 0.0
      %202 = vmatpush1.msra.mxu0 0.0
      %203 = vmatprep.subr.mxu0 0.0
      %204 = vmatpush1.msra.mxu0 0.0
      %205 = vmatprep.subr.mxu0 0.0
      %206 = vmatpush1.msra.mxu0 0.0
      %207 = vmatprep.subr.mxu0 0.0
      %208 = vmatpush1.msra.mxu0 0.0
      %209 = vmatprep.subr.mxu0 0.0
      %210 = vmatpush1.msra.mxu0 0.0
      %211 = vmatprep.mubr.f32.mxu0 0.0
      %212 = vmatmul.mubr.f32.gmra.mrb[0].mxu0 %v145
      %v213 = vpop.f32.mrb[0].mxu0
      %v214 = vadd.f32 %v142, %v213
      %v215 = vpop.f32.mrb[0].mxu0
      %216 = vdwg.mxu0
      %v217 = vld [vmem:[%s1 + $0x10] sm:$0xff]
      %v218 = vld [vmem:[%s1 + $0x18] sm:$0xff]
      %v219 = vld [vmem:[%s1 + $0x20] sm:$0xff]
      %v220 = vld [vmem:[%s1 + $0x28] sm:$0xff]
      %v221 = vld [vmem:[%s1 + $0x98] sm:$0xff]
      %v222 = vld [vmem:[%s1 + $0xb8] sm:$0x1]
      %v223 = vld [vmem:[%s1 + $0xd8] sm:$0x1]
      %vm224 = vcmask 261120
      %v226 = vsel %vm224, %v214, 0
      %228 = vmatprep.subr.mxu0 0.0
      %229 = vmatpush1.msra.mxu0 %v217
      %230 = vmatprep.subr.mxu0 0.0
      %231 = vmatpush1.msra.mxu0 %v218
      %232 = vmatprep.subr.mxu0 0.0
      %233 = vmatpush1.msra.mxu0 %v219
      %234 = vmatprep.subr.mxu0 0.0
      %235 = vmatpush1.msra.mxu0 %v220
      %236 = vmatprep.subr.mxu0 0.0
      %237 = vmatpush1.msra.mxu0 0.0
      %238 = vmatprep.subr.mxu0 0.0
      %239 = vmatpush1.msra.mxu0 0.0
      %240 = vmatprep.subr.mxu0 0.0
      %241 = vmatpush1.msra.mxu0 0.0
      %242 = vmatprep.subr.mxu0 0.0
      %243 = vmatpush1.msra.mxu0 0.0
      %244 = vmatprep.subr.mxu0 0.0
      %245 = vmatpush1.msra.mxu0 0.0
      %246 = vmatprep.subr.mxu0 0.0
      %247 = vmatpush1.msra.mxu0 0.0
      %248 = vmatprep.subr.mxu0 0.0
      %249 = vmatpush1.msra.mxu0 0.0
      %250 = vmatprep.subr.mxu0 0.0
      %251 = vmatpush1.msra.mxu0 0.0
      %252 = vmatprep.subr.mxu0 0.0
      %253 = vmatpush1.msra.mxu0 0.0
      %254 = vmatprep.subr.mxu0 0.0
      %255 = vmatpush1.msra.mxu0 0.0
      %256 = vmatprep.subr.mxu0 0.0
      %257 = vmatpush1.msra.mxu0 0.0
      %258 = vmatprep.subr.mxu0 0.0
      %259 = vmatpush1.msra.mxu0 0.0
      %260 = vmatprep.subr.mxu0 0.0
      %261 = vmatpush1.msra.mxu0 0.0
      %262 = vmatprep.subr.mxu0 0.0
      %263 = vmatpush1.msra.mxu0 0.0
      %264 = vmatprep.subr.mxu0 0.0
      %265 = vmatpush1.msra.mxu0 0.0
      %266 = vmatprep.subr.mxu0 0.0
      %267 = vmatpush1.msra.mxu0 0.0
      %268 = vmatprep.subr.mxu0 0.0
      %269 = vmatpush1.msra.mxu0 0.0
      %270 = vmatprep.subr.mxu0 0.0
      %271 = vmatpush1.msra.mxu0 0.0
      %272 = vmatprep.subr.mxu0 0.0
      %273 = vmatpush1.msra.mxu0 0.0
      %274 = vmatprep.subr.mxu0 0.0
      %275 = vmatpush1.msra.mxu0 0.0
      %276 = vmatprep.subr.mxu0 0.0
      %277 = vmatpush1.msra.mxu0 0.0
      %278 = vmatprep.subr.mxu0 0.0
      %279 = vmatpush1.msra.mxu0 0.0
      %280 = vmatprep.subr.mxu0 0.0
      %281 = vmatpush1.msra.mxu0 0.0
      %282 = vmatprep.subr.mxu0 0.0
      %283 = vmatpush1.msra.mxu0 0.0
      %284 = vmatprep.subr.mxu0 0.0
      %285 = vmatpush1.msra.mxu0 0.0
      %286 = vmatprep.subr.mxu0 0.0
      %287 = vmatpush1.msra.mxu0 0.0
      %288 = vmatprep.subr.mxu0 0.0
      %289 = vmatpush1.msra.mxu0 0.0
      %290 = vmatprep.subr.mxu0 0.0
      %291 = vmatpush1.msra.mxu0 0.0
      %292 = vmatprep.mubr.f32.mxu0 0.0
      %293 = vmatmul.mubr.f32.gmra.mrb[0].mxu0 %v226
      %v294 = vpop.f32.mrb[0].mxu0
      %v295 = vadd.f32 %v221, %v294
      %v296 = vpop.f32.mrb[0].mxu0
      %297 = vdwg.mxu0
      %v298 = vmax.f32 %v295, 0.0
      %v299 = vmul.f32 %v298, %v298
      %301 = vrot.lane.b32.xlu0 %v299, 32
      %v302 = vpop.permute.xlu0 %301
      %v304 = vsel %vm224, %v298, %v302
      %vm305 = vcmask 523264
      %v306 = vsel %vm305, %v304, 0.0
      %v307 = vrot.slane %v306, 4
      %v308 = vadd.f32 %v306, %v307
      %v309 = vrot.slane %v308, 2
      %v310 = vadd.f32 %v308, %v309
      %v311 = vrot.slane %v310, 1
      %v312 = vadd.f32 %v310, %v311
      %v313 = vrcp.pop 8.0
      %v314 = vmul.f32 %v312, %v313
      %v315 = vmul.f32 %v314, %v314
      %317 = vrot.lane.b32.xlu0 %v315, 32
      %v318 = vpop.permute.xlu0 %317
      %v320 = vsub.f32 %v314, %v318
      %v321 = vmax.f32 %v320, 0.0
      %v322 = vadd.f32 %v321, 1e-05
      %v323 = vrsqrt.pop %v322
      %325 = vrot.lane.b32.xlu0 %v323, 96
      %v326 = vpop.permute.xlu0 %325
      %v328 = vmul.f32 %v222, %v326
      %v329 = vmul.f32 %v314, %v328
      %v330 = vsub.f32 %v223, %v329
      %v331 = vlaneseq
      %v332 = vshrl.u32 %v331, 7
      %v333 = vsub.s32 0, %v332
      %v334 = vrot.slane %v328, %v333
      %v335 = vmul.f32 %v298, %v334
      %v336 = vlaneseq
      %v337 = vshrl.u32 %v336, 7
      %v338 = vsub.s32 0, %v337
      %v339 = vrot.slane %v330, %v338
      %v340 = vadd.f32 %v335, %v339
      %v341 = vld [vmem:[%s1 + $0x30] sm:$0xff]
      %v342 = vld [vmem:[%s1 + $0x38] sm:$0xff]
      %v343 = vld [vmem:[%s1 + $0x40] sm:$0xff]
      %v344 = vld [vmem:[%s1 + $0x48] sm:$0xff]
      %v345 = vld [vmem:[%s1 + $0xa0] sm:$0xff]
      %v346 = vld [vmem:[%s1 + $0xc0] sm:$0x1]
      %v347 = vld [vmem:[%s1 + $0xe0] sm:$0x1]
      %v349 = vsel %vm224, %v340, 0
      %351 = vmatprep.subr.mxu0 0.0
      %352 = vmatpush1.msra.mxu0 %v341
      %353 = vmatprep.subr.mxu0 0.0
      %354 = vmatpush1.msra.mxu0 %v342
      %355 = vmatprep.subr.mxu0 0.0
      %356 = vmatpush1.msra.mxu0 %v343
      %357 = vmatprep.subr.mxu0 0.0
      %358 = vmatpush1.msra.mxu0 %v344
      %359 = vmatprep.subr.mxu0 0.0
      %360 = vmatpush1.msra.mxu0 0.0
      %361 = vmatprep.subr.mxu0 0.0
      %362 = vmatpush1.msra.mxu0 0.0
      %363 = vmatprep.subr.mxu0 0.0
      %364 = vmatpush1.msra.mxu0 0.0
      %365 = vmatprep.subr.mxu0 0.0
      %366 = vmatpush1.msra.mxu0 0.0
      %367 = vmatprep.subr.mxu0 0.0
      %368 = vmatpush1.msra.mxu0 0.0
      %369 = vmatprep.subr.mxu0 0.0
      %370 = vmatpush1.msra.mxu0 0.0
      %371 = vmatprep.subr.mxu0 0.0
      %372 = vmatpush1.msra.mxu0 0.0
      %373 = vmatprep.subr.mxu0 0.0
      %374 = vmatpush1.msra.mxu0 0.0
      %375 = vmatprep.subr.mxu0 0.0
      %376 = vmatpush1.msra.mxu0 0.0
      %377 = vmatprep.subr.mxu0 0.0
      %378 = vmatpush1.msra.mxu0 0.0
      %379 = vmatprep.subr.mxu0 0.0
      %380 = vmatpush1.msra.mxu0 0.0
      %381 = vmatprep.subr.mxu0 0.0
      %382 = vmatpush1.msra.mxu0 0.0
      %383 = vmatprep.subr.mxu0 0.0
      %384 = vmatpush1.msra.mxu0 0.0
      %385 = vmatprep.subr.mxu0 0.0
      %386 = vmatpush1.msra.mxu0 0.0
      %387 = vmatprep.subr.mxu0 0.0
      %388 = vmatpush1.msra.mxu0 0.0
      %389 = vmatprep.subr.mxu0 0.0
      %390 = vmatpush1.msra.mxu0 0.0
      %391 = vmatprep.subr.mxu0 0.0
      %392 = vmatpush1.msra.mxu0 0.0
      %393 = vmatprep.subr.mxu0 0.0
      %394 = vmatpush1.msra.mxu0 0.0
      %395 = vmatprep.subr.mxu0 0.0
      %396 = vmatpush1.msra.mxu0 0.0
      %397 = vmatprep.subr.mxu0 0.0
      %398 = vmatpush1.msra.mxu0 0.0
      %399 = vmatprep.subr.mxu0 0.0
      %400 = vmatpush1.msra.mxu0 0.0
      %401 = vmatprep.subr.mxu0 0.0
      %402 = vmatpush1.msra.mxu0 0.0
      %403 = vmatprep.subr.mxu0 0.0
      %404 = vmatpush1.msra.mxu0 0.0
      %405 = vmatprep.subr.mxu0 0.0
      %406 = vmatpush1.msra.mxu0 0.0
      %407 = vmatprep.subr.mxu0 0.0
      %408 = vmatpush1.msra.mxu0 0.0
      %409 = vmatprep.subr.mxu0 0.0
      %410 = vmatpush1.msra.mxu0 0.0
      %411 = vmatprep.subr.mxu0 0.0
      %412 = vmatpush1.msra.mxu0 0.0
      %413 = vmatprep.subr.mxu0 0.0
      %414 = vmatpush1.msra.mxu0 0.0
      %415 = vmatprep.mubr.f32.mxu0 0.0
      %416 = vmatmul.mubr.f32.gmra.mrb[0].mxu0 %v349
      %v417 = vpop.f32.mrb[0].mxu0
      %v418 = vadd.f32 %v345, %v417
      %v419 = vpop.f32.mrb[0].mxu0
      %420 = vdwg.mxu0
      %v421 = vmax.f32 %v418, 0.0
      %v422 = vmul.f32 %v421, %v421
      %424 = vrot.lane.b32.xlu0 %v422, 32
      %v425 = vpop.permute.xlu0 %424
      %v427 = vsel %vm224, %v421, %v425
      %v428 = vsel %vm305, %v427, 0.0
      %v429 = vrot.slane %v428, 4
      %v430 = vadd.f32 %v428, %v429
      %v431 = vrot.slane %v430, 2
      %v432 = vadd.f32 %v430, %v431
      %v433 = vrot.slane %v432, 1
      %v434 = vadd.f32 %v432, %v433
      %v435 = vmul.f32 %v434, %v313
      %v436 = vmul.f32 %v435, %v435
      %438 = vrot.lane.b32.xlu0 %v436, 32
      %v439 = vpop.permute.xlu0 %438
      %v441 = vsub.f32 %v435, %v439
      %v442 = vmax.f32 %v441, 0.0
      %v443 = vadd.f32 %v442, 1e-05
      %v444 = vrsqrt.pop %v443
      %446 = vrot.lane.b32.xlu0 %v444, 96
      %v447 = vpop.permute.xlu0 %446
      %v449 = vmul.f32 %v346, %v447
      %v450 = vmul.f32 %v435, %v449
      %v451 = vsub.f32 %v347, %v450
      %v452 = vlaneseq
      %v453 = vshrl.u32 %v452, 7
      %v454 = vsub.s32 0, %v453
      %v455 = vrot.slane %v449, %v454
      %v456 = vmul.f32 %v421, %v455
      %v457 = vlaneseq
      %v458 = vshrl.u32 %v457, 7
      %v459 = vsub.s32 0, %v458
      %v460 = vrot.slane %v451, %v459
      %v461 = vadd.f32 %v456, %v460
      %v462 = vadd.f32 %v214, %v461
      %v463 = vld [vmem:[%s1 + $0x50] sm:$0xff]
      %v464 = vld [vmem:[%s1 + $0x58] sm:$0xff]
      %v465 = vld [vmem:[%s1 + $0x60] sm:$0xff]
      %v466 = vld [vmem:[%s1 + $0x68] sm:$0xff]
      %v467 = vld [vmem:[%s1 + $0xa8] sm:$0xff]
      %v468 = vld [vmem:[%s1 + $0xc8] sm:$0x1]
      %v469 = vld [vmem:[%s1 + $0xe8] sm:$0x1]
      %v471 = vsel %vm224, %v462, 0
      %473 = vmatprep.subr.mxu0 0.0
      %474 = vmatpush1.msra.mxu0 %v463
      %475 = vmatprep.subr.mxu0 0.0
      %476 = vmatpush1.msra.mxu0 %v464
      %477 = vmatprep.subr.mxu0 0.0
      %478 = vmatpush1.msra.mxu0 %v465
      %479 = vmatprep.subr.mxu0 0.0
      %480 = vmatpush1.msra.mxu0 %v466
      %481 = vmatprep.subr.mxu0 0.0
      %482 = vmatpush1.msra.mxu0 0.0
      %483 = vmatprep.subr.mxu0 0.0
      %484 = vmatpush1.msra.mxu0 0.0
      %485 = vmatprep.subr.mxu0 0.0
      %486 = vmatpush1.msra.mxu0 0.0
      %487 = vmatprep.subr.mxu0 0.0
      %488 = vmatpush1.msra.mxu0 0.0
      %489 = vmatprep.subr.mxu0 0.0
      %490 = vmatpush1.msra.mxu0 0.0
      %491 = vmatprep.subr.mxu0 0.0
      %492 = vmatpush1.msra.mxu0 0.0
      %493 = vmatprep.subr.mxu0 0.0
      %494 = vmatpush1.msra.mxu0 0.0
      %495 = vmatprep.subr.mxu0 0.0
      %496 = vmatpush1.msra.mxu0 0.0
      %497 = vmatprep.subr.mxu0 0.0
      %498 = vmatpush1.msra.mxu0 0.0
      %499 = vmatprep.subr.mxu0 0.0
      %500 = vmatpush1.msra.mxu0 0.0
      %501 = vmatprep.subr.mxu0 0.0
      %502 = vmatpush1.msra.mxu0 0.0
      %503 = vmatprep.subr.mxu0 0.0
      %504 = vmatpush1.msra.mxu0 0.0
      %505 = vmatprep.subr.mxu0 0.0
      %506 = vmatpush1.msra.mxu0 0.0
      %507 = vmatprep.subr.mxu0 0.0
      %508 = vmatpush1.msra.mxu0 0.0
      %509 = vmatprep.subr.mxu0 0.0
      %510 = vmatpush1.msra.mxu0 0.0
      %511 = vmatprep.subr.mxu0 0.0
      %512 = vmatpush1.msra.mxu0 0.0
      %513 = vmatprep.subr.mxu0 0.0
      %514 = vmatpush1.msra.mxu0 0.0
      %515 = vmatprep.subr.mxu0 0.0
      %516 = vmatpush1.msra.mxu0 0.0
      %517 = vmatprep.subr.mxu0 0.0
      %518 = vmatpush1.msra.mxu0 0.0
      %519 = vmatprep.subr.mxu0 0.0
      %520 = vmatpush1.msra.mxu0 0.0
      %521 = vmatprep.subr.mxu0 0.0
      %522 = vmatpush1.msra.mxu0 0.0
      %523 = vmatprep.subr.mxu0 0.0
      %524 = vmatpush1.msra.mxu0 0.0
      %525 = vmatprep.subr.mxu0 0.0
      %526 = vmatpush1.msra.mxu0 0.0
      %527 = vmatprep.subr.mxu0 0.0
      %528 = vmatpush1.msra.mxu0 0.0
      %529 = vmatprep.subr.mxu0 0.0
      %530 = vmatpush1.msra.mxu0 0.0
      %531 = vmatprep.subr.mxu0 0.0
      %532 = vmatpush1.msra.mxu0 0.0
      %533 = vmatprep.subr.mxu0 0.0
      %534 = vmatpush1.msra.mxu0 0.0
      %535 = vmatprep.subr.mxu0 0.0
      %536 = vmatpush1.msra.mxu0 0.0
      %537 = vmatprep.mubr.f32.mxu0 0.0
      %538 = vmatmul.mubr.f32.gmra.mrb[0].mxu0 %v471
      %v539 = vpop.f32.mrb[0].mxu0
      %v540 = vadd.f32 %v467, %v539
      %v541 = vpop.f32.mrb[0].mxu0
      %542 = vdwg.mxu0
      %v543 = vmax.f32 %v540, 0.0
      %v544 = vmul.f32 %v543, %v543
      %546 = vrot.lane.b32.xlu0 %v544, 32
      %v547 = vpop.permute.xlu0 %546
      %v549 = vsel %vm224, %v543, %v547
      %v550 = vsel %vm305, %v549, 0.0
      %v551 = vrot.slane %v550, 4
      %v552 = vadd.f32 %v550, %v551
      %v553 = vrot.slane %v552, 2
      %v554 = vadd.f32 %v552, %v553
      %v555 = vrot.slane %v554, 1
      %v556 = vadd.f32 %v554, %v555
      %v557 = vmul.f32 %v556, %v313
      %v558 = vmul.f32 %v557, %v557
      %560 = vrot.lane.b32.xlu0 %v558, 32
      %v561 = vpop.permute.xlu0 %560
      %v563 = vsub.f32 %v557, %v561
      %v564 = vmax.f32 %v563, 0.0
      %v565 = vadd.f32 %v564, 1e-05
      %v566 = vrsqrt.pop %v565
      %568 = vrot.lane.b32.xlu0 %v566, 96
      %v569 = vpop.permute.xlu0 %568
      %v571 = vmul.f32 %v468, %v569
      %v572 = vmul.f32 %v557, %v571
      %v573 = vsub.f32 %v469, %v572
      %v574 = vlaneseq
      %v575 = vshrl.u32 %v574, 7
      %v576 = vsub.s32 0, %v575
      %v577 = vrot.slane %v571, %v576
      %v578 = vmul.f32 %v543, %v577
      %v579 = vlaneseq
      %v580 = vshrl.u32 %v579, 7
      %v581 = vsub.s32 0, %v580
      %v582 = vrot.slane %v573, %v581
      %v583 = vadd.f32 %v578, %v582
      %v584 = vld [vmem:[%s1 + $0x70] sm:$0xff]
      %v585 = vld [vmem:[%s1 + $0x78] sm:$0xff]
      %v586 = vld [vmem:[%s1 + $0x80] sm:$0xff]
      %v587 = vld [vmem:[%s1 + $0x88] sm:$0xff]
      %v588 = vld [vmem:[%s1 + $0xb0] sm:$0xff]
      %v589 = vld [vmem:[%s1 + $0xd0] sm:$0x1]
      %v590 = vld [vmem:[%s1 + $0xf0] sm:$0x1]
      %v592 = vsel %vm224, %v583, 0
      %594 = vmatprep.subr.mxu0 0.0
      %595 = vmatpush1.msra.mxu0 %v584
      %596 = vmatprep.subr.mxu0 0.0
      %597 = vmatpush1.msra.mxu0 %v585
      %598 = vmatprep.subr.mxu0 0.0
      %599 = vmatpush1.msra.mxu0 %v586
      %600 = vmatprep.subr.mxu0 0.0
      %601 = vmatpush1.msra.mxu0 %v587
      %602 = vmatprep.subr.mxu0 0.0
      %603 = vmatpush1.msra.mxu0 0.0
      %604 = vmatprep.subr.mxu0 0.0
      %605 = vmatpush1.msra.mxu0 0.0
      %606 = vmatprep.subr.mxu0 0.0
      %607 = vmatpush1.msra.mxu0 0.0
      %608 = vmatprep.subr.mxu0 0.0
      %609 = vmatpush1.msra.mxu0 0.0
      %610 = vmatprep.subr.mxu0 0.0
      %611 = vmatpush1.msra.mxu0 0.0
      %612 = vmatprep.subr.mxu0 0.0
      %613 = vmatpush1.msra.mxu0 0.0
      %614 = vmatprep.subr.mxu0 0.0
      %615 = vmatpush1.msra.mxu0 0.0
      %616 = vmatprep.subr.mxu0 0.0
      %617 = vmatpush1.msra.mxu0 0.0
      %618 = vmatprep.subr.mxu0 0.0
      %619 = vmatpush1.msra.mxu0 0.0
      %620 = vmatprep.subr.mxu0 0.0
      %621 = vmatpush1.msra.mxu0 0.0
      %622 = vmatprep.subr.mxu0 0.0
      %623 = vmatpush1.msra.mxu0 0.0
      %624 = vmatprep.subr.mxu0 0.0
      %625 = vmatpush1.msra.mxu0 0.0
      %626 = vmatprep.subr.mxu0 0.0
      %627 = vmatpush1.msra.mxu0 0.0
      %628 = vmatprep.subr.mxu0 0.0
      %629 = vmatpush1.msra.mxu0 0.0
      %630 = vmatprep.subr.mxu0 0.0
      %631 = vmatpush1.msra.mxu0 0.0
      %632 = vmatprep.subr.mxu0 0.0
      %633 = vmatpush1.msra.mxu0 0.0
      %634 = vmatprep.subr.mxu0 0.0
      %635 = vmatpush1.msra.mxu0 0.0
      %636 = vmatprep.subr.mxu0 0.0
      %637 = vmatpush1.msra.mxu0 0.0
      %638 = vmatprep.subr.mxu0 0.0
      %639 = vmatpush1.msra.mxu0 0.0
      %640 = vmatprep.subr.mxu0 0.0
      %641 = vmatpush1.msra.mxu0 0.0
      %642 = vmatprep.subr.mxu0 0.0
      %643 = vmatpush1.msra.mxu0 0.0
      %644 = vmatprep.subr.mxu0 0.0
      %645 = vmatpush1.msra.mxu0 0.0
      %646 = vmatprep.subr.mxu0 0.0
      %647 = vmatpush1.msra.mxu0 0.0
      %648 = vmatprep.subr.mxu0 0.0
      %649 = vmatpush1.msra.mxu0 0.0
      %650 = vmatprep.subr.mxu0 0.0
      %651 = vmatpush1.msra.mxu0 0.0
      %652 = vmatprep.subr.mxu0 0.0
      %653 = vmatpush1.msra.mxu0 0.0
      %654 = vmatprep.subr.mxu0 0.0
      %655 = vmatpush1.msra.mxu0 0.0
      %656 = vmatprep.subr.mxu0 0.0
      %657 = vmatpush1.msra.mxu0 0.0
      %658 = vmatprep.mubr.f32.mxu0 0.0
      %659 = vmatmul.mubr.f32.gmra.mrb[0].mxu0 %v592
      %v660 = vpop.f32.mrb[0].mxu0
      %v661 = vadd.f32 %v588, %v660
      %v662 = vpop.f32.mrb[0].mxu0
      %663 = vdwg.mxu0
      %v664 = vmax.f32 %v661, 0.0
      %v665 = vmul.f32 %v664, %v664
      %667 = vrot.lane.b32.xlu0 %v665, 32
      %v668 = vpop.permute.xlu0 %667
      %v670 = vsel %vm224, %v664, %v668
      %v671 = vsel %vm305, %v670, 0.0
      %v672 = vrot.slane %v671, 4
      %v673 = vadd.f32 %v671, %v672
      %v674 = vrot.slane %v673, 2
      %v675 = vadd.f32 %v673, %v674
      %v676 = vrot.slane %v675, 1
      %v677 = vadd.f32 %v675, %v676
      %v678 = vmul.f32 %v677, %v313
      %v679 = vmul.f32 %v678, %v678
      %681 = vrot.lane.b32.xlu0 %v679, 32
      %v682 = vpop.permute.xlu0 %681
      %v684 = vsub.f32 %v678, %v682
      %v685 = vmax.f32 %v684, 0.0
      %v686 = vadd.f32 %v685, 1e-05
      %v687 = vrsqrt.pop %v686
      %689 = vrot.lane.b32.xlu0 %v687, 96
      %v690 = vpop.permute.xlu0 %689
      %v692 = vmul.f32 %v589, %v690
      %v693 = vmul.f32 %v678, %v692
      %v694 = vsub.f32 %v590, %v693
      %v695 = vlaneseq
      %v696 = vshrl.u32 %v695, 7
      %v697 = vsub.s32 0, %v696
      %v698 = vrot.slane %v692, %v697
      %v699 = vmul.f32 %v664, %v698
      %v700 = vlaneseq
      %v701 = vshrl.u32 %v700, 7
      %v702 = vsub.s32 0, %v701
      %v703 = vrot.slane %v694, %v702
      %v704 = vadd.f32 %v699, %v703
      %v705 = vadd.f32 %v462, %v704
      %v706 = vld [vmem:[%s1 + $0xf8] sm:$0xff]
      %v707 = vld [vmem:[%s1 + $0x100] sm:$0xff]
      %v708 = vmul.f32 %v705, %v706
      %v709 = vadd.f32 %v708, %v707
      %v710 = vsel %vm224, %v709, 0.0
      %711 = vadd.xlane.f32.xlu0 %v710
      %v712 = vpop.xlane.xlu0 %711
      %vm713 = vcmask 7168
      %714 = vst.msk [vmem:[%s138] sm:$0xff] %vm713, %v712
      %p715 = scmp.lt.s32.totalorder %s13, 15
      %s716 = scalar_select %p715, %s13, 15
      %s717 = smul.addr %s716, 8
      %s718 = scalar_lea.vmem %s2, %s717
      // Predicated region
      $region29: #{residual_model.1} parent=27 // pred_check
        %p719 = pneg %p78
      $region30: #{residual_model.1} parent=27 // pred_check_branch
        %721 = sbr.rel (%p719) target = $region32
      $region31: #{residual_model.1} parent=27 // pred_region
        _
      $region32: #{residual_model.1} parent=27 // pred_fallthru
        _
    $region28: #{residual_model.1} parent=5 // pred_fallthru
      _
    %p722 = scmp.le.s32.totalorder 2, %s8
    // Predicated region
    $region33: #{residual_model.1} parent=5 // pred_check
      %p723 = pneg %p722
    $region34: #{residual_model.1} parent=5 // pred_check_branch
      %725 = sbr.rel (%p723) target = $region36
    $region35: #{residual_model.1} parent=5 // pred_region
      %s726 = ssub.s32 %s8, 2
      // Predicated region
      $region37: #{residual_model.1} parent=35 // pred_check
        %p727 = pneg %p84
      $region38: #{residual_model.1} parent=35 // pred_check_branch
        %729 = sbr.rel (%p727) target = $region40
      $region39: #{residual_model.1} parent=35 // pred_region
        %p730 = scmp.lt.s32.totalorder %s14, 15
        %s731 = scalar_select %p730, %s14, 15
        %s732 = smul.addr %s731, 8
        %s733 = scalar_lea.vmem %s2, %s732
      $region40: #{residual_model.1} parent=35 // pred_fallthru
        _
    $region36: #{residual_model.1} parent=5 // pred_fallthru
      _
  $region6: #{residual_model.1} parent=0 // loop_footer
    %s12 = sadd.s32 1, %s8
  $region7: #{residual_model.1} parent=0 // loop_footer_branch
    %7 = sbr.rel target = $region3
  $region8: #{residual_model.1} parent=0 // loop_exit
    _

</llo_original>
